<compile_context>
chip_gen: v7x
topology: tpu7x:2x2x1
jax: 0.10.0
libtpu: 0.0.40
codegen_flags: <defaults>
</compile_context>

<pallas_src>
import jax
import jax.numpy as jnp
from jax.experimental import pallas as pl
from jax.experimental.pallas import tpu as pltpu


def _round_up(x, m):
    return (x + m - 1) // m * m


def _proj_kernel(x_ref, w_ref, o_ref):
    # x_ref: (tm, K)   w_ref: (K, d_path)   o_ref: (tm, d_path)
    o_ref[...] = jnp.dot(
        x_ref[...], w_ref[...], preferred_element_type=jnp.float32
    ).astype(o_ref.dtype)


def path_embedding(feat, paths, weight, *, tm_max=1024,
                   compute_dtype=jnp.bfloat16, out_dtype=None):
    """
    Args:
      feat:   [n_node, d_node] float32   (g.ndata['feat'])
      paths:  [n_node, k_path, l_path] int32; values in [0, n_node] where index
              n_node (or torch-style -1) selects the appended zero "padding" row.
      weight: [d_path, d_node * l_path] float32 (nn.Linear weight, bias=False)

    Returns:
      path_embed: [n_node, k_path, d_path], dtype `out_dtype` (default feat.dtype).
    """
    n_node, d_node = feat.shape
    _, k_path, l_path = paths.shape
    d_path = weight.shape[0]
    out_dtype = feat.dtype if out_dtype is None else out_dtype

    M = n_node * k_path
    K = l_path * d_node

    # ---- glue (pure indexing, XLA): cast BEFORE the gather so the gathered
    # [M, K] operand is written in compute_dtype, not float32.
    feat_pad = jnp.concatenate(
        [feat.astype(compute_dtype), jnp.zeros((1, d_node), compute_dtype)], axis=0)
    x = feat_pad[paths].reshape(M, K)                         # [M, K]
    w_t = jnp.transpose(weight).astype(compute_dtype)         # [K, d_path]

    # ---- layout-aware VMEM footprint / row-tile sizing ----
    in_isz = jnp.dtype(compute_dtype).itemsize
    out_isz = jnp.dtype(out_dtype).itemsize
    tm_align = max(8, 32 // in_isz)            # 8 rows/vreg f32, 16 for bf16
    K_lanes = _round_up(K, 128)                # physical lane occupancy of an x row
    N_lanes = _round_up(d_path, 128)           # physical lane occupancy of an out row

    try:
        vmem_cap = int(pltpu.get_tpu_info().vmem_capacity_bytes)
    except Exception:
        vmem_cap = 64 * 1024 * 1024            # conservative: v7x per-TC VMEM

    # resident (double-buffered) weight tile
    w_bytes = 2 * _round_up(K, tm_align) * N_lanes * in_isz
    # per-row cost: double-buffered x row + double-buffered out row
    per_row = 2 * K_lanes * in_isz + 2 * N_lanes * out_isz
    budget = min(vmem_cap // 2, 48 * 1024 * 1024) - w_bytes - 2 * 1024 * 1024
    budget = max(budget, 1 * 1024 * 1024)

    tm_cap = max(tm_align, (budget // max(per_row, 1)) // tm_align * tm_align)
    tm = min(tm_max, tm_cap)
    # keep >= ~8 row steps (>= 4/core under megacore) when there is enough work,
    # so the input DMA / output writeback actually overlap with compute.
    if M >= 8 * 128:
        tm = min(tm, max(128, _round_up(pl.cdiv(M, 8), tm_align)))
    tm = max(tm_align, tm // tm_align * tm_align)
    if tm >= M:
        tm = M      # single full-extent block; legal for any M (block == array dim)

    grid = (pl.cdiv(M, tm),)                   # ragged last tile handled by Pallas

    # Declare a VMEM limit consistent with the tile math (v5e default is 16 MiB).
    tile_bytes = (2 * tm * K_lanes * in_isz + 2 * tm * N_lanes * out_isz + w_bytes)
    vmem_limit = int(min(vmem_cap * 3 // 4,
                         max(tile_bytes + 4 * 1024 * 1024, 16 * 1024 * 1024)))

    out = pl.pallas_call(
        _proj_kernel,
        out_shape=jax.ShapeDtypeStruct((M, d_path), out_dtype),
        grid_spec=pl.GridSpec(
            grid=grid,
            in_specs=[
                pl.BlockSpec((tm, K), lambda i: (i, 0)),        # row tile of x
                pl.BlockSpec((K, d_path), lambda i: (0, 0)),    # weight, fully resident
            ],
            out_specs=pl.BlockSpec((tm, d_path), lambda i: (i, 0)),
        ),
        compiler_params=pltpu.CompilerParams(
            dimension_semantics=("parallel",),
            vmem_limit_bytes=vmem_limit,
        ),
    )(x, w_t)

    return out.reshape(n_node, k_path, d_path)


def _reference(feat, paths, weight):
    feat_pad = jnp.concatenate([feat, jnp.zeros((1, feat.shape[1]), feat.dtype)], axis=0)
    path_feat = feat_pad[paths]
    x = path_feat.reshape(*paths.shape[:2], -1)
    return jnp.einsum("nkf,df->nkd", x, weight)


if __name__ == "__main__":
    # small, module-consistent shapes
    n_node, d_node, k_path, l_path, d_path = 8, 8, 4, 3, 32

    key = jax.random.PRNGKey(0)
    k_feat, k_w, k_paths = jax.random.split(key, 3)

    feat = jax.random.normal(k_feat, (n_node, d_node), dtype=jnp.float32)
    # deterministic parameter init (nn.Linear(d_node*l_path, d_path, bias=False))
    weight = jax.random.normal(k_w, (d_path, d_node * l_path), dtype=jnp.float32) * 0.02
    # paths with values in [0, n_node]; value n_node hits the appended zero row
    paths = jax.random.randint(
        k_paths, (n_node, k_path, l_path), 0, n_node + 1, dtype=jnp.int32
    )

    ref = _reference(feat, paths, weight)

    # f32 compute path: must match the reference tightly.
    out_f32 = jax.block_until_ready(
        path_embedding(feat, paths, weight, compute_dtype=jnp.float32)
    )
    assert out_f32.shape == (n_node, k_path, d_path)
    assert jnp.allclose(out_f32, ref, atol=1e-5, rtol=1e-5), "f32 mismatch vs reference"

    # default bf16-input path (f32 accumulation): looser tolerance.
    out_bf16 = jax.block_until_ready(path_embedding(feat, paths, weight))
    assert out_bf16.shape == (n_node, k_path, d_path)
    assert jnp.allclose(out_bf16, ref, atol=2e-2, rtol=2e-2), "bf16 mismatch vs reference"

    print("KERNEL_OK")
</pallas_src>

<mosaic_0001>
module attributes {stable_mosaic.version = 11 : i64} {
  func.func @_proj_kernel(%arg0: i32, %arg1: memref<32x24xf32, #tpu.memory_space<vmem>>, %arg2: memref<24x32xf32, #tpu.memory_space<vmem>>, %arg3: memref<32x32xf32, #tpu.memory_space<vmem>>) attributes {dimension_semantics = [#tpu.dimension_semantics<parallel>], iteration_bounds = array<i64: 1>, scalar_prefetch = 0 : i64, scratch_operands = 0 : i64, tpu.core_type = #tpu.core_type<tc>, window_params = [{transform_indices = @transform_0, window_bounds = array<i64: 32, 24>}, {pipeline_mode = #tpu.pipeline_mode<synchronous>, transform_indices = @transform_1, window_bounds = array<i64: 24, 32>}, {transform_indices = @transform_2, window_bounds = array<i64: 32, 32>}]} {
    %c0 = arith.constant 0 : index
    %c0_0 = arith.constant 0 : index
    %0 = vector.load %arg1[%c0, %c0_0] : memref<32x24xf32, #tpu.memory_space<vmem>>, vector<32x24xf32>
    %c0_1 = arith.constant 0 : index
    %c0_2 = arith.constant 0 : index
    %1 = vector.load %arg2[%c0_1, %c0_2] : memref<24x32xf32, #tpu.memory_space<vmem>>, vector<24x32xf32>
    %cst = arith.constant dense<0.000000e+00> : vector<32x32xf32>
    %2 = tpu.matmul %0, %1, %cst {dimension_numbers = #tpu.dot_dimension_numbers<[1], [0], [0], [1], [0, 0, 1, 1], [], []>} : vector<32x24xf32>, vector<24x32xf32>, vector<32x32xf32> -> vector<32x32xf32>
    %c0_3 = arith.constant 0 : index
    %c0_4 = arith.constant 0 : index
    %3 = vector.load %arg3[%c0_3, %c0_4] : memref<32x32xf32, #tpu.memory_space<vmem>>, vector<32x32xf32>
    tpu.vector_store %arg3[%c0_3, %c0_4], %2 {strides = array<i32>} : memref<32x32xf32, #tpu.memory_space<vmem>>, vector<32x32xf32>,
    return
  }
  func.func @transform_0(%arg0: i32) -> (i32, i32) {
    %c0_i32 = arith.constant 0 : i32
    %c0_i32_0 = arith.constant 0 : i32
    return %arg0, %c0_i32 : i32, i32
  }
  func.func @transform_1(%arg0: i32) -> (i32, i32) {
    %c0_i32 = arith.constant 0 : i32
    %c0_i32_0 = arith.constant 0 : i32
    %c0_i32_1 = arith.constant 0 : i32
    return %c0_i32, %c0_i32_0 : i32, i32
  }
  func.func @transform_2(%arg0: i32) -> (i32, i32) {
    %c0_i32 = arith.constant 0 : i32
    %c0_i32_0 = arith.constant 0 : i32
    return %arg0, %c0_i32 : i32, i32
  }
}

</mosaic_0001>

<llo_original>
// kernel: tpu_custom_call.1
$region0: #{tpu_custom_call.1}
  #allocation0 [shape = 'u32[]', space=smem, size = 0x4, offset = 0x4, fixed_abs, tag = 'smem constant byte address 0x4 - core index']
  #allocation1 [shape = 'u32[144,128]{1,0:T(1,128)}', space=vmem, size = 0x12000, scoped, tag = 'internal scratch']
  %s0 = inlined_call_operand.vmem [shape: f32[32,24], index: 0, kind: input, shape index: {}]
  %s1 = inlined_call_operand.vmem [shape: f32[24,32], index: 1, kind: input, shape index: {}]
  %s2 = inlined_call_operand.hbm [shape: f32[32,32], index: 2, kind: output, shape index: {}]
  %s3 = sld [smem:[#allocation0]]
  $region18: #{tpu_custom_call.1} parent=0
    _
  %s5 = ssub.s32 1, %s3
  %s6 = scalar_select 0, %s5, %s3
  $region1: #{tpu_custom_call.1} parent=0
    #allocation2 [shape = 'u8[16384]{0}', space=vmem, size = 0x4000, scoped, tag = 'output window, operand 0, single buffered']
    #allocation3 [shape = 's32[1]{0}', space=sflag, size = 0x4, scoped, tag = 'scoped memory for tpu_custom_call.1']
    %7 = vsyncpa [#allocation3], 0
    // Predicated region
    $region2: #{tpu_custom_call.1} parent=1 // pred_check
      _
    $region3: #{tpu_custom_call.1} parent=1 // pred_check_branch
      %9 = sbr.rel (0) target = $region5
    $region4: #{tpu_custom_call.1} parent=1 // pred_region
      _
    $region5: #{tpu_custom_call.1} parent=1 // pred_fallthru
      _
    // Predicated region
    $region6: #{tpu_custom_call.1} parent=1 // pred_check
      _
    $region7: #{tpu_custom_call.1} parent=1 // pred_check_branch
      %11 = sbr.rel (0) target = $region9
    $region8: #{tpu_custom_call.1} parent=1 // pred_region
      _
    $region9: #{tpu_custom_call.1} parent=1 // pred_fallthru
      _
    %v12 = vld [vmem:[%s0] sm:$0xff]
    %v13 = vld [vmem:[%s0 + $0x8] sm:$0xff]
    %v14 = vld [vmem:[%s0 + $0x10] sm:$0xff]
    %v15 = vld [vmem:[%s0 + $0x18] sm:$0xff]
    %v16 = vld [vmem:[%s1] sm:$0xff]
    %v17 = vld [vmem:[%s1 + $0x8] sm:$0xff]
    %v18 = vld [vmem:[%s1 + $0x10] sm:$0xff]
    %vm19 = vcmask 195584
    %v21 = vsel %vm19, %v12, 0
    %v24 = vsel %vm19, %v13, 0
    %v27 = vsel %vm19, %v14, 0
    %v30 = vsel %vm19, %v15, 0
    %32 = vmatprep.subr.mxu0 0.0
    %33 = vmatpush1.msra.mxu0 %v16
    %34 = vmatprep.subr.mxu0 0.0
    %35 = vmatpush1.msra.mxu0 %v17
    %36 = vmatprep.subr.mxu0 0.0
    %37 = vmatpush1.msra.mxu0 %v18
    %38 = vmatprep.subr.mxu0 0.0
    %39 = vmatpush1.msra.mxu0 0.0
    %40 = vmatprep.subr.mxu0 0.0
    %41 = vmatpush1.msra.mxu0 0.0
    %42 = vmatprep.subr.mxu0 0.0
    %43 = vmatpush1.msra.mxu0 0.0
    %44 = vmatprep.subr.mxu0 0.0
    %45 = vmatpush1.msra.mxu0 0.0
    %46 = vmatprep.subr.mxu0 0.0
    %47 = vmatpush1.msra.mxu0 0.0
    %48 = vmatprep.subr.mxu0 0.0
    %49 = vmatpush1.msra.mxu0 0.0
    %50 = vmatprep.subr.mxu0 0.0
    %51 = vmatpush1.msra.mxu0 0.0
    %52 = vmatprep.subr.mxu0 0.0
    %53 = vmatpush1.msra.mxu0 0.0
    %54 = vmatprep.subr.mxu0 0.0
    %55 = vmatpush1.msra.mxu0 0.0
    %56 = vmatprep.subr.mxu0 0.0
    %57 = vmatpush1.msra.mxu0 0.0
    %58 = vmatprep.subr.mxu0 0.0
    %59 = vmatpush1.msra.mxu0 0.0
    %60 = vmatprep.subr.mxu0 0.0
    %61 = vmatpush1.msra.mxu0 0.0
    %62 = vmatprep.subr.mxu0 0.0
    %63 = vmatpush1.msra.mxu0 0.0
    %64 = vmatprep.subr.mxu0 0.0
    %65 = vmatpush1.msra.mxu0 0.0
    %66 = vmatprep.subr.mxu0 0.0
    %67 = vmatpush1.msra.mxu0 0.0
    %68 = vmatprep.subr.mxu0 0.0
    %69 = vmatpush1.msra.mxu0 0.0
    %70 = vmatprep.subr.mxu0 0.0
    %71 = vmatpush1.msra.mxu0 0.0
    %72 = vmatprep.subr.mxu0 0.0
    %73 = vmatpush1.msra.mxu0 0.0
    %74 = vmatprep.subr.mxu0 0.0
    %75 = vmatpush1.msra.mxu0 0.0
    %76 = vmatprep.subr.mxu0 0.0
    %77 = vmatpush1.msra.mxu0 0.0
    %78 = vmatprep.subr.mxu0 0.0
    %79 = vmatpush1.msra.mxu0 0.0
    %80 = vmatprep.subr.mxu0 0.0
    %81 = vmatpush1.msra.mxu0 0.0
    %82 = vmatprep.subr.mxu0 0.0
    %83 = vmatpush1.msra.mxu0 0.0
    %84 = vmatprep.subr.mxu0 0.0
    %85 = vmatpush1.msra.mxu0 0.0
    %86 = vmatprep.subr.mxu0 0.0
    %87 = vmatpush1.msra.mxu0 0.0
    %88 = vmatprep.subr.mxu0 0.0
    %89 = vmatpush1.msra.mxu0 0.0
    %90 = vmatprep.subr.mxu0 0.0
    %91 = vmatpush1.msra.mxu0 0.0
    %92 = vmatprep.subr.mxu0 0.0
    %93 = vmatpush1.msra.mxu0 0.0
    %94 = vmatprep.subr.mxu0 0.0
    %95 = vmatpush1.msra.mxu0 0.0
    %96 = vmatprep.mubr.f32.mxu0 0.0
    %97 = vmatmul.mubr.f32.gmra.mrb[0].mxu0 %v21
    %v98 = vpop.f32.mrb[0].mxu0
    %v99 = vadd.f32 0.0, %v98
    %v100 = vpop.f32.mrb[0].mxu0
    %101 = vmatprep.mubr.f32.mxu0 0.0
    %102 = vmatmul.mubr.f32.gmra.mrb[0].mxu0 %v24
    %v103 = vpop.f32.mrb[0].mxu0
    %v104 = vadd.f32 0.0, %v103
    %v105 = vpop.f32.mrb[0].mxu0
    %106 = vmatprep.mubr.f32.mxu0 0.0
    %107 = vmatmul.mubr.f32.gmra.mrb[0].mxu0 %v27
    %v108 = vpop.f32.mrb[0].mxu0
    %v109 = vadd.f32 0.0, %v108
    %v110 = vpop.f32.mrb[0].mxu0
    %111 = vmatprep.mubr.f32.mxu0 0.0
    %112 = vmatmul.mubr.f32.gmra.mrb[0].mxu0 %v30
    %v113 = vpop.f32.mrb[0].mxu0
    %v114 = vadd.f32 0.0, %v113
    %v115 = vpop.f32.mrb[0].mxu0
    %116 = vdwg.mxu0
    %vm117 = vcmask 261120
    %118 = vst.msk [vmem:[#allocation2] sm:$0xff] %vm117, %v99
    %119 = vst.msk [vmem:[#allocation2 + $0x8] sm:$0xff] %vm117, %v104
    %120 = vst.msk [vmem:[#allocation2 + $0x10] sm:$0xff] %vm117, %v109
    %121 = vst.msk [vmem:[#allocation2 + $0x18] sm:$0xff] %vm117, %v114
    // Predicated region
    $region10: #{tpu_custom_call.1} parent=1 // pred_check
      _
    $region11: #{tpu_custom_call.1} parent=1 // pred_check_branch
      %123 = sbr.rel (0) target = $region13
    $region12: #{tpu_custom_call.1} parent=1 // pred_region
      %s125 = ssub.s32 512, 512
      %126 = vsyncadd [#allocation3], %s125
      %s127 = sshll.u32 [#allocation2], 4
      %s128 = int_to_ptr.vmem [resolvable:$true] %s127
      %133 = dma.vmem_to_hbm [thread:$0]  %s128, 512, %s2, [#allocation3], 128, 128, 8
    $region13: #{tpu_custom_call.1} parent=1 // pred_fallthru
      _
    // Predicated region
    $region14: #{tpu_custom_call.1} parent=1 // pred_check
      _
    $region15: #{tpu_custom_call.1} parent=1 // pred_check_branch
      %135 = sbr.rel (0) target = $region17
    $region16: #{tpu_custom_call.1} parent=1 // pred_region
      %136 = dma.done [#allocation3], 512
    $region17: #{tpu_custom_call.1} parent=1 // pred_fallthru
      _
    %137 = vsyncpa [#allocation3], 1

</llo_original>
